<compile_context>
chip_gen: v7x
topology: tpu7x:2x2x1
jax: 0.10.0
libtpu: 0.0.40
codegen_flags: <defaults>
</compile_context>

<pallas_src>
import functools

import jax
import jax.numpy as jnp
from jax.experimental import pallas as pl
from jax.experimental.pallas import tpu as pltpu


G = 8  # batch rows packed per sublane row of the grouped x layout


def _sigmoid(z):
    # sigmoid(z) = 1 / (1 + exp(-z)); exp and the approximate reciprocal both
    # run on the EUP slot (effectively free in an HBM-bound kernel).
    return pl.reciprocal(1.0 + jnp.exp(-z), approx=True)


def mlp_kernel(x_ref, w1_ref, b1_ref, w2_ref, b2_ref, w3_ref, b3_ref, o_ref):
    """Fused MLP on the grouped-by-8 batch layout.

    x_ref:  (rows_blk, G*F)    8 batch rows packed per sublane row (lane-dense)
    wN_ref: block-diagonal expanded weights kron(I_G, W_N.T)
    bN_ref: (1, G*H_N)         bias tiled G times, broadcasts over sublanes
    o_ref:  (rows_blk, G*H3)   grouped output (un-grouped by wrapper reshape)
    """
    xg = x_ref[...]                                                   # (rows, G*F)

    h = jnp.dot(xg, w1_ref[...], preferred_element_type=jnp.float32)
    h = _sigmoid(h + b1_ref[...])                                     # (rows, G*H1)

    h = jnp.dot(h.astype(w2_ref.dtype), w2_ref[...],
                preferred_element_type=jnp.float32)
    h = _sigmoid(h + b2_ref[...])                                     # (rows, G*H2)

    out = jnp.dot(h.astype(w3_ref.dtype), w3_ref[...],
                  preferred_element_type=jnp.float32)
    out = out + b3_ref[...]                                           # (rows, G*H3)
    o_ref[...] = out.astype(o_ref.dtype)


def _round_up(x, m):
    return ((x + m - 1) // m) * m


def _cdiv(a, b):
    return -(-a // b)


@functools.partial(jax.jit, static_argnames=("target_step_bytes", "max_block_b"))
def mlp_forward(x, params, target_step_bytes=1 << 20, max_block_b=16384):
    """Run the fused MLP kernel.

    target_step_bytes: useful x bytes per grid step (~1 MiB hits ~85% of the
        measured HBM roofline curve while keeping double-buffered tiles well
        under every generation's default scoped-VMEM limit).
    max_block_b: hard cap on the batch tile (multiple of 128).
    """
    w1, b1, w2, b2, w3, b3 = params
    B, F = x.shape
    out_dtype = x.dtype
    itemsize = jnp.dtype(x.dtype).itemsize

    H1 = w1.shape[0]   # 10
    H2 = w2.shape[0]   # 8
    H3 = w3.shape[0]   # 1

    # ---- batch tiling: derive block_b from B (bounded padding) -------------
    Bp128 = _round_up(max(B, 1), 128)
    n_steps = max(1, _cdiv(Bp128 * F * itemsize, target_step_bytes))
    if Bp128 >= 256:
        n_steps = max(n_steps, 2)          # v7x: let both TensorCores pull HBM
    block_b = _round_up(_cdiv(Bp128, n_steps), 128)
    block_b = min(block_b, max(128, _round_up(max_block_b, 128)))
    grid_n = _cdiv(Bp128, block_b)
    Bp = grid_n * block_b                  # pad is <= ~128 rows per grid step
    if Bp != B:
        x = jnp.pad(x, ((0, Bp - B), (0, 0)))

    # ---- grouped layout: (Bp, F) -> (Bp/G, G*F), a free contiguous reshape --
    xg = x.reshape(Bp // G, G * F)
    rows_blk = block_b // G

    # Block-diagonal expanded weights (tiny, built once per trace):
    #   W_e = kron(I_G, W.T)  =>  xg @ W1_e applies W1 independently to each of
    # the G packed batch rows; biases are tiled G times along the lane axis.
    eye = jnp.eye(G, dtype=w1.dtype)
    w1e = jnp.kron(eye, w1.T)                       # (G*F,  G*H1)
    w2e = jnp.kron(eye, w2.T)                       # (G*H1, G*H2)
    w3e = jnp.kron(eye, w3.T)                       # (G*H2, G*H3)
    b1e = jnp.tile(b1.reshape(1, H1), (1, G))       # (1, G*H1)
    b2e = jnp.tile(b2.reshape(1, H2), (1, G))       # (1, G*H2)
    b3e = jnp.tile(b3.reshape(1, H3), (1, G))       # (1, G*H3)

    cost = pl.CostEstimate(
        flops=2 * Bp * (F * H1 + H1 * H2 + H2 * H3),
        transcendentals=Bp * (H1 + H2),
        bytes_accessed=Bp * F * itemsize + Bp * H3 * itemsize,
    )

    out = pl.pallas_call(
        mlp_kernel,
        out_shape=jax.ShapeDtypeStruct((Bp // G, G * H3), out_dtype),
        grid_spec=pltpu.PrefetchScalarGridSpec(
            num_scalar_prefetch=0,
            grid=(grid_n,),
            in_specs=[
                pl.BlockSpec((rows_blk, G * F), lambda i: (i, 0)),   # x (grouped)
                pl.BlockSpec((G * F, G * H1), lambda i: (0, 0)),     # w1e (resident)
                pl.BlockSpec((1, G * H1), lambda i: (0, 0)),         # b1e
                pl.BlockSpec((G * H1, G * H2), lambda i: (0, 0)),    # w2e
                pl.BlockSpec((1, G * H2), lambda i: (0, 0)),         # b2e
                pl.BlockSpec((G * H2, G * H3), lambda i: (0, 0)),    # w3e
                pl.BlockSpec((1, G * H3), lambda i: (0, 0)),         # b3e
            ],
            out_specs=pl.BlockSpec((rows_blk, G * H3), lambda i: (i, 0)),
        ),
        compiler_params=pltpu.CompilerParams(
            dimension_semantics=("parallel",),
        ),
        cost_estimate=cost,
    )(xg, w1e, b1e, w2e, b2e, w3e, b3e)

    # (Bp/G, G*H3) -> (Bp, H3) is a free contiguous reshape; slice off padding.
    return out.reshape(Bp, H3)[:B]


def init_params(key, num_features):
    """nn.Linear-style init (U(-1/sqrt(fan_in), 1/sqrt(fan_in))); weights kept in
    PyTorch (out, in) layout, biases as (out,)."""
    dims = [(num_features, 10), (10, 8), (8, 1)]
    params = []
    for fan_in, fan_out in dims:
        key, kw, kb = jax.random.split(key, 3)
        bound = 1.0 / jnp.sqrt(fan_in)
        w = jax.random.uniform(kw, (fan_out, fan_in), jnp.float32, -bound, bound)
        b = jax.random.uniform(kb, (fan_out,), jnp.float32, -bound, bound)
        params += [w, b]
    return tuple(params)


def mlp_reference(x, params):
    w1, b1, w2, b2, w3, b3 = params
    h1 = jax.nn.sigmoid(x @ w1.T + b1)
    h2 = jax.nn.sigmoid(h1 @ w2.T + b2)
    return h2 @ w3.T + b3


if __name__ == "__main__":
    key = jax.random.PRNGKey(0)
    k_param, k_x1, k_x2 = jax.random.split(key, 3)

    num_features = 16
    params = init_params(k_param, num_features)

    # Small batch (single grid step).
    batch = 8
    x = jax.random.normal(k_x1, (batch, num_features), jnp.float32)
    out = jax.block_until_ready(mlp_forward(x, params))
    ref = mlp_reference(x, params)
    assert out.shape == (batch, 1), out.shape
    assert jnp.allclose(out, ref, atol=2e-3, rtol=2e-3), "mismatch vs reference (B=8)"

    # Ragged batch (exercises >=2 grid steps + bounded padding path).
    batch2 = 300
    x2 = jax.random.normal(k_x2, (batch2, num_features), jnp.float32)
    out2 = jax.block_until_ready(mlp_forward(x2, params))
    ref2 = mlp_reference(x2, params)
    assert out2.shape == (batch2, 1), out2.shape
    assert jnp.allclose(out2, ref2, atol=2e-3, rtol=2e-3), "mismatch vs reference (B=300)"

    print("KERNEL_OK")
</pallas_src>

<mosaic_0001>
module attributes {stable_mosaic.version = 11 : i64} {
  func.func @mlp_kernel(%arg0: i32, %arg1: memref<16x128xf32, #tpu.memory_space<vmem>>, %arg2: memref<128x80xf32, #tpu.memory_space<vmem>>, %arg3: memref<1x80xf32, #tpu.memory_space<vmem>>, %arg4: memref<80x64xf32, #tpu.memory_space<vmem>>, %arg5: memref<1x64xf32, #tpu.memory_space<vmem>>, %arg6: memref<64x8xf32, #tpu.memory_space<vmem>>, %arg7: memref<1x8xf32, #tpu.memory_space<vmem>>, %arg8: memref<16x8xf32, #tpu.memory_space<vmem>>) attributes {dimension_semantics = [#tpu.dimension_semantics<parallel>], iteration_bounds = array<i64: 1>, scalar_prefetch = 0 : i64, scratch_operands = 0 : i64, tpu.core_type = #tpu.core_type<tc>, window_params = [{transform_indices = @transform_0, window_bounds = array<i64: 16, 128>}, {pipeline_mode = #tpu.pipeline_mode<synchronous>, transform_indices = @transform_1, window_bounds = array<i64: 128, 80>}, {pipeline_mode = #tpu.pipeline_mode<synchronous>, transform_indices = @transform_2, window_bounds = array<i64: 1, 80>}, {pipeline_mode = #tpu.pipeline_mode<synchronous>, transform_indices = @transform_3, window_bounds = array<i64: 80, 64>}, {pipeline_mode = #tpu.pipeline_mode<synchronous>, transform_indices = @transform_4, window_bounds = array<i64: 1, 64>}, {pipeline_mode = #tpu.pipeline_mode<synchronous>, transform_indices = @transform_5, window_bounds = array<i64: 64, 8>}, {pipeline_mode = #tpu.pipeline_mode<synchronous>, transform_indices = @transform_6, window_bounds = array<i64: 1, 8>}, {transform_indices = @transform_7, window_bounds = array<i64: 16, 8>}]} {
    %c0 = arith.constant 0 : index
    %c0_0 = arith.constant 0 : index
    %0 = vector.load %arg1[%c0, %c0_0] : memref<16x128xf32, #tpu.memory_space<vmem>>, vector<16x128xf32>
    %c0_1 = arith.constant 0 : index
    %c0_2 = arith.constant 0 : index
    %1 = vector.load %arg2[%c0_1, %c0_2] : memref<128x80xf32, #tpu.memory_space<vmem>>, vector<128x80xf32>
    %cst = arith.constant dense<0.000000e+00> : vector<16x80xf32>
    %2 = tpu.matmul %0, %1, %cst {dimension_numbers = #tpu.dot_dimension_numbers<[1], [0], [0], [1], [0, 0, 1, 1], [], []>} : vector<16x128xf32>, vector<128x80xf32>, vector<16x80xf32> -> vector<16x80xf32>
    %c0_3 = arith.constant 0 : index
    %c0_4 = arith.constant 0 : index
    %3 = vector.load %arg3[%c0_3, %c0_4] : memref<1x80xf32, #tpu.memory_space<vmem>>, vector<1x80xf32>
    %4 = vector.broadcast %3 : vector<1x80xf32> to vector<16x80xf32>
    %5 = arith.addf %2, %4 : vector<16x80xf32>
    %cst_5 = arith.constant 0.000000e+00 : f32
    %6 = vector.broadcast %cst_5 : f32 to vector<16x80xf32>
    %7 = arith.subf %6, %5 : vector<16x80xf32>
    %8 = math.exp %7 : vector<16x80xf32>
    %cst_6 = arith.constant 1.000000e+00 : f32
    %9 = vector.broadcast %cst_6 : f32 to vector<16x80xf32>
    %10 = arith.addf %9, %8 : vector<16x80xf32>
    %11 = tpu.reciprocal %10 {approx = true} : vector<16x80xf32> -> vector<16x80xf32>
    %c0_7 = arith.constant 0 : index
    %c0_8 = arith.constant 0 : index
    %12 = vector.load %arg4[%c0_7, %c0_8] : memref<80x64xf32, #tpu.memory_space<vmem>>, vector<80x64xf32>
    %cst_9 = arith.constant dense<0.000000e+00> : vector<16x64xf32>
    %13 = tpu.matmul %11, %12, %cst_9 {dimension_numbers = #tpu.dot_dimension_numbers<[1], [0], [0], [1], [0, 0, 1, 1], [], []>} : vector<16x80xf32>, vector<80x64xf32>, vector<16x64xf32> -> vector<16x64xf32>
    %c0_10 = arith.constant 0 : index
    %c0_11 = arith.constant 0 : index
    %14 = vector.load %arg5[%c0_10, %c0_11] : memref<1x64xf32, #tpu.memory_space<vmem>>, vector<1x64xf32>
    %15 = vector.broadcast %14 : vector<1x64xf32> to vector<16x64xf32>
    %16 = arith.addf %13, %15 : vector<16x64xf32>
    %cst_12 = arith.constant 0.000000e+00 : f32
    %17 = vector.broadcast %cst_12 : f32 to vector<16x64xf32>
    %18 = arith.subf %17, %16 : vector<16x64xf32>
    %19 = math.exp %18 : vector<16x64xf32>
    %cst_13 = arith.constant 1.000000e+00 : f32
    %20 = vector.broadcast %cst_13 : f32 to vector<16x64xf32>
    %21 = arith.addf %20, %19 : vector<16x64xf32>
    %22 = tpu.reciprocal %21 {approx = true} : vector<16x64xf32> -> vector<16x64xf32>
    %c0_14 = arith.constant 0 : index
    %c0_15 = arith.constant 0 : index
    %23 = vector.load %arg6[%c0_14, %c0_15] : memref<64x8xf32, #tpu.memory_space<vmem>>, vector<64x8xf32>
    %cst_16 = arith.constant dense<0.000000e+00> : vector<16x8xf32>
    %24 = tpu.matmul %22, %23, %cst_16 {dimension_numbers = #tpu.dot_dimension_numbers<[1], [0], [0], [1], [0, 0, 1, 1], [], []>} : vector<16x64xf32>, vector<64x8xf32>, vector<16x8xf32> -> vector<16x8xf32>
    %c0_17 = arith.constant 0 : index
    %c0_18 = arith.constant 0 : index
    %25 = vector.load %arg7[%c0_17, %c0_18] : memref<1x8xf32, #tpu.memory_space<vmem>>, vector<1x8xf32>
    %26 = vector.broadcast %25 : vector<1x8xf32> to vector<16x8xf32>
    %27 = arith.addf %24, %26 : vector<16x8xf32>
    %c0_19 = arith.constant 0 : index
    %c0_20 = arith.constant 0 : index
    %28 = vector.load %arg8[%c0_19, %c0_20] : memref<16x8xf32, #tpu.memory_space<vmem>>, vector<16x8xf32>
    tpu.vector_store %arg8[%c0_19, %c0_20], %27 {strides = array<i32>} : memref<16x8xf32, #tpu.memory_space<vmem>>, vector<16x8xf32>,
    return
  }
  func.func @transform_0(%arg0: i32) -> (i32, i32) {
    %c0_i32 = arith.constant 0 : i32
    %c0_i32_0 = arith.constant 0 : i32
    return %arg0, %c0_i32 : i32, i32
  }
  func.func @transform_1(%arg0: i32) -> (i32, i32) {
    %c0_i32 = arith.constant 0 : i32
    %c0_i32_0 = arith.constant 0 : i32
    %c0_i32_1 = arith.constant 0 : i32
    return %c0_i32, %c0_i32_0 : i32, i32
  }
  func.func @transform_2(%arg0: i32) -> (i32, i32) {
    %c0_i32 = arith.constant 0 : i32
    %c0_i32_0 = arith.constant 0 : i32
    %c0_i32_1 = arith.constant 0 : i32
    return %c0_i32, %c0_i32_0 : i32, i32
  }
  func.func @transform_3(%arg0: i32) -> (i32, i32) {
    %c0_i32 = arith.constant 0 : i32
    %c0_i32_0 = arith.constant 0 : i32
    %c0_i32_1 = arith.constant 0 : i32
    return %c0_i32, %c0_i32_0 : i32, i32
  }
  func.func @transform_4(%arg0: i32) -> (i32, i32) {
    %c0_i32 = arith.constant 0 : i32
    %c0_i32_0 = arith.constant 0 : i32
    %c0_i32_1 = arith.constant 0 : i32
    return %c0_i32, %c0_i32_0 : i32, i32
  }
  func.func @transform_5(%arg0: i32) -> (i32, i32) {
    %c0_i32 = arith.constant 0 : i32
    %c0_i32_0 = arith.constant 0 : i32
    %c0_i32_1 = arith.constant 0 : i32
    return %c0_i32, %c0_i32_0 : i32, i32
  }
  func.func @transform_6(%arg0: i32) -> (i32, i32) {
    %c0_i32 = arith.constant 0 : i32
    %c0_i32_0 = arith.constant 0 : i32
    %c0_i32_1 = arith.constant 0 : i32
    return %c0_i32, %c0_i32_0 : i32, i32
  }
  func.func @transform_7(%arg0: i32) -> (i32, i32) {
    %c0_i32 = arith.constant 0 : i32
    %c0_i32_0 = arith.constant 0 : i32
    return %arg0, %c0_i32 : i32, i32
  }
}

</mosaic_0001>

<llo_original>
// kernel: mlp_forward.1
$region0: #{mlp_forward.1}
  #allocation0 [shape = 'u32[]', space=smem, size = 0x4, offset = 0x4, fixed_abs, tag = 'smem constant byte address 0x4 - core index']
  #allocation1 [shape = 'u32[144,128]{1,0:T(1,128)}', space=vmem, size = 0x12000, scoped, tag = 'internal scratch']
  %s0 = inlined_call_operand.vmem [shape: f32[16,128], index: 0, kind: input, shape index: {}]
  %s1 = inlined_call_operand.vmem [shape: f32[128,80], index: 1, kind: input, shape index: {}]
  %s2 = inlined_call_operand.vmem [shape: f32[1,80], index: 2, kind: input, shape index: {}]
  %s3 = inlined_call_operand.vmem [shape: f32[80,64], index: 3, kind: input, shape index: {}]
  %s4 = inlined_call_operand.vmem [shape: f32[1,64], index: 4, kind: input, shape index: {}]
  %s5 = inlined_call_operand.vmem [shape: f32[64,8], index: 5, kind: input, shape index: {}]
  %s6 = inlined_call_operand.vmem [shape: f32[1,8], index: 6, kind: input, shape index: {}]
  %s7 = inlined_call_operand.vmem [shape: f32[16,8], index: 7, kind: output, shape index: {}]
  %s8 = sld [smem:[#allocation0]]
  $region38: #{mlp_forward.1} parent=0
    _
  %s10 = ssub.s32 1, %s8
  %s11 = scalar_select 0, %s10, %s8
  // Predicated region
  $region2: #{mlp_forward.1} parent=0 // pred_check
    _
  $region3: #{mlp_forward.1} parent=0 // pred_check_branch
    %13 = sbr.rel (0) target = $region5
  $region4: #{mlp_forward.1} parent=0 // pred_region
    _
  $region5: #{mlp_forward.1} parent=0 // pred_fallthru
    _
  // Predicated region
  $region6: #{mlp_forward.1} parent=0 // pred_check
    _
  $region7: #{mlp_forward.1} parent=0 // pred_check_branch
    %15 = sbr.rel (0) target = $region9
  $region8: #{mlp_forward.1} parent=0 // pred_region
    _
  $region9: #{mlp_forward.1} parent=0 // pred_fallthru
    _
  // Predicated region
  $region10: #{mlp_forward.1} parent=0 // pred_check
    _
  $region11: #{mlp_forward.1} parent=0 // pred_check_branch
    %17 = sbr.rel (0) target = $region13
  $region12: #{mlp_forward.1} parent=0 // pred_region
    _
  $region13: #{mlp_forward.1} parent=0 // pred_fallthru
    _
  // Predicated region
  $region14: #{mlp_forward.1} parent=0 // pred_check
    _
  $region15: #{mlp_forward.1} parent=0 // pred_check_branch
    %19 = sbr.rel (0) target = $region17
  $region16: #{mlp_forward.1} parent=0 // pred_region
    _
  $region17: #{mlp_forward.1} parent=0 // pred_fallthru
    _
  // Predicated region
  $region18: #{mlp_forward.1} parent=0 // pred_check
    _
  $region19: #{mlp_forward.1} parent=0 // pred_check_branch
    %21 = sbr.rel (0) target = $region21
  $region20: #{mlp_forward.1} parent=0 // pred_region
    _
  $region21: #{mlp_forward.1} parent=0 // pred_fallthru
    _
  // Predicated region
  $region22: #{mlp_forward.1} parent=0 // pred_check
    _
  $region23: #{mlp_forward.1} parent=0 // pred_check_branch
    %23 = sbr.rel (0) target = $region25
  $region24: #{mlp_forward.1} parent=0 // pred_region
    _
  $region25: #{mlp_forward.1} parent=0 // pred_fallthru
    _
  // Predicated region
  $region26: #{mlp_forward.1} parent=0 // pred_check
    _
  $region27: #{mlp_forward.1} parent=0 // pred_check_branch
    %25 = sbr.rel (0) target = $region29
  $region28: #{mlp_forward.1} parent=0 // pred_region
    _
  $region29: #{mlp_forward.1} parent=0 // pred_fallthru
    _
  %v26 = vld [vmem:[%s0] sm:$0xff]
  %v27 = vld [vmem:[%s0 + $0x8] sm:$0xff]
  %v28 = vld [vmem:[%s1] sm:$0xff]
  %v29 = vld [vmem:[%s1 + $0x8] sm:$0xff]
  %v30 = vld [vmem:[%s1 + $0x10] sm:$0xff]
  %v31 = vld [vmem:[%s1 + $0x18] sm:$0xff]
  %v32 = vld [vmem:[%s1 + $0x20] sm:$0xff]
  %v33 = vld [vmem:[%s1 + $0x28] sm:$0xff]
  %v34 = vld [vmem:[%s1 + $0x30] sm:$0xff]
  %v35 = vld [vmem:[%s1 + $0x38] sm:$0xff]
  %v36 = vld [vmem:[%s1 + $0x40] sm:$0xff]
  %v37 = vld [vmem:[%s1 + $0x48] sm:$0xff]
  %v38 = vld [vmem:[%s1 + $0x50] sm:$0xff]
  %v39 = vld [vmem:[%s1 + $0x58] sm:$0xff]
  %v40 = vld [vmem:[%s1 + $0x60] sm:$0xff]
  %v41 = vld [vmem:[%s1 + $0x68] sm:$0xff]
  %v42 = vld [vmem:[%s1 + $0x70] sm:$0xff]
  %v43 = vld [vmem:[%s1 + $0x78] sm:$0xff]
  %v44 = vld [vmem:[%s2] sm:$0x1]
  %v46 = vlaneseq
  %v47 = vshrl.u32 %v46, 7
  %v48 = vsub.s32 0, %v47
  %v49 = vrot.slane %v44, %v48
  %51 = vmatprep.subr.mxu0 0.0
  %52 = vmatpush1.msra.mxu0 %v28
  %53 = vmatprep.subr.mxu0 0.0
  %54 = vmatpush1.msra.mxu0 %v29
  %55 = vmatprep.subr.mxu0 0.0
  %56 = vmatpush1.msra.mxu0 %v30
  %57 = vmatprep.subr.mxu0 0.0
  %58 = vmatpush1.msra.mxu0 %v31
  %59 = vmatprep.subr.mxu0 0.0
  %60 = vmatpush1.msra.mxu0 %v32
  %61 = vmatprep.subr.mxu0 0.0
  %62 = vmatpush1.msra.mxu0 %v33
  %63 = vmatprep.subr.mxu0 0.0
  %64 = vmatpush1.msra.mxu0 %v34
  %65 = vmatprep.subr.mxu0 0.0
  %66 = vmatpush1.msra.mxu0 %v35
  %67 = vmatprep.subr.mxu0 0.0
  %68 = vmatpush1.msra.mxu0 %v36
  %69 = vmatprep.subr.mxu0 0.0
  %70 = vmatpush1.msra.mxu0 %v37
  %71 = vmatprep.subr.mxu0 0.0
  %72 = vmatpush1.msra.mxu0 %v38
  %73 = vmatprep.subr.mxu0 0.0
  %74 = vmatpush1.msra.mxu0 %v39
  %75 = vmatprep.subr.mxu0 0.0
  %76 = vmatpush1.msra.mxu0 %v40
  %77 = vmatprep.subr.mxu0 0.0
  %78 = vmatpush1.msra.mxu0 %v41
  %79 = vmatprep.subr.mxu0 0.0
  %80 = vmatpush1.msra.mxu0 %v42
  %81 = vmatprep.subr.mxu0 0.0
  %82 = vmatpush1.msra.mxu0 %v43
  %83 = vmatprep.subr.mxu0 0.0
  %84 = vmatpush1.msra.mxu0 0.0
  %85 = vmatprep.subr.mxu0 0.0
  %86 = vmatpush1.msra.mxu0 0.0
  %87 = vmatprep.subr.mxu0 0.0
  %88 = vmatpush1.msra.mxu0 0.0
  %89 = vmatprep.subr.mxu0 0.0
  %90 = vmatpush1.msra.mxu0 0.0
  %91 = vmatprep.subr.mxu0 0.0
  %92 = vmatpush1.msra.mxu0 0.0
  %93 = vmatprep.subr.mxu0 0.0
  %94 = vmatpush1.msra.mxu0 0.0
  %95 = vmatprep.subr.mxu0 0.0
  %96 = vmatpush1.msra.mxu0 0.0
  %97 = vmatprep.subr.mxu0 0.0
  %98 = vmatpush1.msra.mxu0 0.0
  %99 = vmatprep.subr.mxu0 0.0
  %100 = vmatpush1.msra.mxu0 0.0
  %101 = vmatprep.subr.mxu0 0.0
  %102 = vmatpush1.msra.mxu0 0.0
  %103 = vmatprep.subr.mxu0 0.0
  %104 = vmatpush1.msra.mxu0 0.0
  %105 = vmatprep.subr.mxu0 0.0
  %106 = vmatpush1.msra.mxu0 0.0
  %107 = vmatprep.subr.mxu0 0.0
  %108 = vmatpush1.msra.mxu0 0.0
  %109 = vmatprep.subr.mxu0 0.0
  %110 = vmatpush1.msra.mxu0 0.0
  %111 = vmatprep.subr.mxu0 0.0
  %112 = vmatpush1.msra.mxu0 0.0
  %113 = vmatprep.subr.mxu0 0.0
  %114 = vmatpush1.msra.mxu0 0.0
  %115 = vmatprep.mubr.f32.mxu0 0.0
  %116 = vmatmul.mubr.f32.gmra.mrb[0].mxu0 %v26
  %v117 = vpop.f32.mrb[0].mxu0
  %v118 = vadd.f32 %v49, %v117
  %v119 = vpop.f32.mrb[0].mxu0
  %120 = vmatprep.mubr.f32.mxu0 0.0
  %121 = vmatmul.mubr.f32.gmra.mrb[0].mxu0 %v27
  %v122 = vpop.f32.mrb[0].mxu0
  %v123 = vadd.f32 %v49, %v122
  %v124 = vpop.f32.mrb[0].mxu0
  %125 = vdwg.mxu0
  %v126 = vsub.f32 0.0, %v118
  %v127 = vsub.f32 0.0, %v123
  %v128 = vmul.f32 %v126, 1.442695
  %v129 = vpow.pop %v128
  %v130 = vmul.f32 %v127, 1.442695
  %v131 = vpow.pop %v130
  %v132 = vadd.f32 %v129, 1.0
  %v133 = vadd.f32 %v131, 1.0
  %v134 = vrcp.pop %v132
  %v135 = vrcp.pop %v133
  %v136 = vld [vmem:[%s3] sm:$0xff]
  %v137 = vld [vmem:[%s3 + $0x8] sm:$0xff]
  %v138 = vld [vmem:[%s3 + $0x10] sm:$0xff]
  %v139 = vld [vmem:[%s3 + $0x18] sm:$0xff]
  %v140 = vld [vmem:[%s3 + $0x20] sm:$0xff]
  %v141 = vld [vmem:[%s3 + $0x28] sm:$0xff]
  %v142 = vld [vmem:[%s3 + $0x30] sm:$0xff]
  %v143 = vld [vmem:[%s3 + $0x38] sm:$0xff]
  %v144 = vld [vmem:[%s3 + $0x40] sm:$0xff]
  %v145 = vld [vmem:[%s3 + $0x48] sm:$0xff]
  %v146 = vld [vmem:[%s4] sm:$0x1]
  %v148 = vlaneseq
  %v149 = vshrl.u32 %v148, 7
  %v150 = vsub.s32 0, %v149
  %v151 = vrot.slane %v146, %v150
  %vm153 = vcmask 654336
  %v155 = vsel %vm153, %v134, 0
  %v158 = vsel %vm153, %v135, 0
  %160 = vmatprep.subr.mxu0 0.0
  %161 = vmatpush1.msra.mxu0 %v136
  %162 = vmatprep.subr.mxu0 0.0
  %163 = vmatpush1.msra.mxu0 %v137
  %164 = vmatprep.subr.mxu0 0.0
  %165 = vmatpush1.msra.mxu0 %v138
  %166 = vmatprep.subr.mxu0 0.0
  %167 = vmatpush1.msra.mxu0 %v139
  %168 = vmatprep.subr.mxu0 0.0
  %169 = vmatpush1.msra.mxu0 %v140
  %170 = vmatprep.subr.mxu0 0.0
  %171 = vmatpush1.msra.mxu0 %v141
  %172 = vmatprep.subr.mxu0 0.0
  %173 = vmatpush1.msra.mxu0 %v142
  %174 = vmatprep.subr.mxu0 0.0
  %175 = vmatpush1.msra.mxu0 %v143
  %176 = vmatprep.subr.mxu0 0.0
  %177 = vmatpush1.msra.mxu0 %v144
  %178 = vmatprep.subr.mxu0 0.0
  %179 = vmatpush1.msra.mxu0 %v145
  %180 = vmatprep.subr.mxu0 0.0
  %181 = vmatpush1.msra.mxu0 0.0
  %182 = vmatprep.subr.mxu0 0.0
  %183 = vmatpush1.msra.mxu0 0.0
  %184 = vmatprep.subr.mxu0 0.0
  %185 = vmatpush1.msra.mxu0 0.0
  %186 = vmatprep.subr.mxu0 0.0
  %187 = vmatpush1.msra.mxu0 0.0
  %188 = vmatprep.subr.mxu0 0.0
  %189 = vmatpush1.msra.mxu0 0.0
  %190 = vmatprep.subr.mxu0 0.0
  %191 = vmatpush1.msra.mxu0 0.0
  %192 = vmatprep.subr.mxu0 0.0
  %193 = vmatpush1.msra.mxu0 0.0
  %194 = vmatprep.subr.mxu0 0.0
  %195 = vmatpush1.msra.mxu0 0.0
  %196 = vmatprep.subr.mxu0 0.0
  %197 = vmatpush1.msra.mxu0 0.0
  %198 = vmatprep.subr.mxu0 0.0
  %199 = vmatpush1.msra.mxu0 0.0
  %200 = vmatprep.subr.mxu0 0.0
  %201 = vmatpush1.msra.mxu0 0.0
  %202 = vmatprep.subr.mxu0 0.0
  %203 = vmatpush1.msra.mxu0 0.0
  %204 = vmatprep.subr.mxu0 0.0
  %205 = vmatpush1.msra.mxu0 0.0
  %206 = vmatprep.subr.mxu0 0.0
  %207 = vmatpush1.msra.mxu0 0.0
  %208 = vmatprep.subr.mxu0 0.0
  %209 = vmatpush1.msra.mxu0 0.0
  %210 = vmatprep.subr.mxu0 0.0
  %211 = vmatpush1.msra.mxu0 0.0
  %212 = vmatprep.subr.mxu0 0.0
  %213 = vmatpush1.msra.mxu0 0.0
  %214 = vmatprep.subr.mxu0 0.0
  %215 = vmatpush1.msra.mxu0 0.0
  %216 = vmatprep.subr.mxu0 0.0
  %217 = vmatpush1.msra.mxu0 0.0
  %218 = vmatprep.subr.mxu0 0.0
  %219 = vmatpush1.msra.mxu0 0.0
  %220 = vmatprep.subr.mxu0 0.0
  %221 = vmatpush1.msra.mxu0 0.0
  %222 = vmatprep.subr.mxu0 0.0
  %223 = vmatpush1.msra.mxu0 0.0
  %224 = vmatprep.mubr.f32.mxu0 0.0
  %225 = vmatmul.mubr.f32.gmra.mrb[0].mxu0 %v155
  %v226 = vpop.f32.mrb[0].mxu0
  %v227 = vadd.f32 %v151, %v226
  %v228 = vpop.f32.mrb[0].mxu0
  %229 = vmatprep.mubr.f32.mxu0 0.0
  %230 = vmatmul.mubr.f32.gmra.mrb[0].mxu0 %v158
  %v231 = vpop.f32.mrb[0].mxu0
  %v232 = vadd.f32 %v151, %v231
  %v233 = vpop.f32.mrb[0].mxu0
  %234 = vdwg.mxu0
  %v235 = vsub.f32 0.0, %v227
  %v236 = vsub.f32 0.0, %v232
  %v237 = vmul.f32 %v235, 1.442695
  %v238 = vpow.pop %v237
  %v239 = vmul.f32 %v236, 1.442695
  %v240 = vpow.pop %v239
  %v241 = vadd.f32 %v238, 1.0
  %v242 = vadd.f32 %v240, 1.0
  %v243 = vrcp.pop %v241
  %v244 = vrcp.pop %v242
  %v245 = vld [vmem:[%s5] sm:$0xff]
  %v246 = vld [vmem:[%s5 + $0x8] sm:$0xff]
  %v247 = vld [vmem:[%s5 + $0x10] sm:$0xff]
  %v248 = vld [vmem:[%s5 + $0x18] sm:$0xff]
  %v249 = vld [vmem:[%s5 + $0x20] sm:$0xff]
  %v250 = vld [vmem:[%s5 + $0x28] sm:$0xff]
  %v251 = vld [vmem:[%s5 + $0x30] sm:$0xff]
  %v252 = vld [vmem:[%s5 + $0x38] sm:$0xff]
  %v253 = vld [vmem:[%s6] sm:$0x1]
  %v255 = vlaneseq
  %v256 = vshrl.u32 %v255, 7
  %v257 = vsub.s32 0, %v256
  %v258 = vrot.slane %v253, %v257
  %vm260 = vcmask 523264
  %v262 = vsel %vm260, %v243, 0
  %v265 = vsel %vm260, %v244, 0
  %267 = vmatprep.subr.mxu0 0.0
  %268 = vmatpush1.msra.mxu0 %v245
  %269 = vmatprep.subr.mxu0 0.0
  %270 = vmatpush1.msra.mxu0 %v246
  %271 = vmatprep.subr.mxu0 0.0
  %272 = vmatpush1.msra.mxu0 %v247
  %273 = vmatprep.subr.mxu0 0.0
  %274 = vmatpush1.msra.mxu0 %v248
  %275 = vmatprep.subr.mxu0 0.0
  %276 = vmatpush1.msra.mxu0 %v249
  %277 = vmatprep.subr.mxu0 0.0
  %278 = vmatpush1.msra.mxu0 %v250
  %279 = vmatprep.subr.mxu0 0.0
  %280 = vmatpush1.msra.mxu0 %v251
  %281 = vmatprep.subr.mxu0 0.0
  %282 = vmatpush1.msra.mxu0 %v252
  %283 = vmatprep.subr.mxu0 0.0
  %284 = vmatpush1.msra.mxu0 0.0
  %285 = vmatprep.subr.mxu0 0.0
  %286 = vmatpush1.msra.mxu0 0.0
  %287 = vmatprep.subr.mxu0 0.0
  %288 = vmatpush1.msra.mxu0 0.0
  %289 = vmatprep.subr.mxu0 0.0
  %290 = vmatpush1.msra.mxu0 0.0
  %291 = vmatprep.subr.mxu0 0.0
  %292 = vmatpush1.msra.mxu0 0.0
  %293 = vmatprep.subr.mxu0 0.0
  %294 = vmatpush1.msra.mxu0 0.0
  %295 = vmatprep.subr.mxu0 0.0
  %296 = vmatpush1.msra.mxu0 0.0
  %297 = vmatprep.subr.mxu0 0.0
  %298 = vmatpush1.msra.mxu0 0.0
  %299 = vmatprep.subr.mxu0 0.0
  %300 = vmatpush1.msra.mxu0 0.0
  %301 = vmatprep.subr.mxu0 0.0
  %302 = vmatpush1.msra.mxu0 0.0
  %303 = vmatprep.subr.mxu0 0.0
  %304 = vmatpush1.msra.mxu0 0.0
  %305 = vmatprep.subr.mxu0 0.0
  %306 = vmatpush1.msra.mxu0 0.0
  %307 = vmatprep.subr.mxu0 0.0
  %308 = vmatpush1.msra.mxu0 0.0
  %309 = vmatprep.subr.mxu0 0.0
  %310 = vmatpush1.msra.mxu0 0.0
  %311 = vmatprep.subr.mxu0 0.0
  %312 = vmatpush1.msra.mxu0 0.0
  %313 = vmatprep.subr.mxu0 0.0
  %314 = vmatpush1.msra.mxu0 0.0
  %315 = vmatprep.subr.mxu0 0.0
  %316 = vmatpush1.msra.mxu0 0.0
  %317 = vmatprep.subr.mxu0 0.0
  %318 = vmatpush1.msra.mxu0 0.0
  %319 = vmatprep.subr.mxu0 0.0
  %320 = vmatpush1.msra.mxu0 0.0
  %321 = vmatprep.subr.mxu0 0.0
  %322 = vmatpush1.msra.mxu0 0.0
  %323 = vmatprep.subr.mxu0 0.0
  %324 = vmatpush1.msra.mxu0 0.0
  %325 = vmatprep.subr.mxu0 0.0
  %326 = vmatpush1.msra.mxu0 0.0
  %327 = vmatprep.subr.mxu0 0.0
  %328 = vmatpush1.msra.mxu0 0.0
  %329 = vmatprep.subr.mxu0 0.0
  %330 = vmatpush1.msra.mxu0 0.0
  %331 = vmatprep.mubr.f32.mxu0 0.0
  %332 = vmatmul.mubr.f32.gmra.mrb[0].mxu0 %v262
  %v333 = vpop.f32.mrb[0].mxu0
  %v334 = vadd.f32 %v258, %v333
  %v335 = vpop.f32.mrb[0].mxu0
  %336 = vmatprep.mubr.f32.mxu0 0.0
  %337 = vmatmul.mubr.f32.gmra.mrb[0].mxu0 %v265
  %v338 = vpop.f32.mrb[0].mxu0
  %v339 = vadd.f32 %v258, %v338
  %v340 = vpop.f32.mrb[0].mxu0
  %341 = vdwg.mxu0
  %vm342 = vcmask 64512
  %343 = vst.msk [vmem:[%s7] sm:$0xff] %vm342, %v334
  %344 = vst.msk [vmem:[%s7 + $0x8] sm:$0xff] %vm342, %v339
  // Predicated region
  $region30: #{mlp_forward.1} parent=0 // pred_check
    _
  $region31: #{mlp_forward.1} parent=0 // pred_check_branch
    %346 = sbr.rel (0) target = $region33
  $region32: #{mlp_forward.1} parent=0 // pred_region
    _
  $region33: #{mlp_forward.1} parent=0 // pred_fallthru
    _
  // Predicated region
  $region34: #{mlp_forward.1} parent=0 // pred_check
    _
  $region35: #{mlp_forward.1} parent=0 // pred_check_branch
    %348 = sbr.rel (0) target = $region37
  $region36: #{mlp_forward.1} parent=0 // pred_region
    _
  $region37: #{mlp_forward.1} parent=0 // pred_fallthru
    _

</llo_original>
